<compile_context>
chip_gen: v5e
topology: v5e:2x2
jax: 0.10.0
libtpu: 0.0.40
codegen_flags: <defaults>
</compile_context>

<pallas_src>
import functools

import jax
import jax.numpy as jnp
from jax.experimental import pallas as pl
from jax.experimental.pallas import tpu as pltpu


def word_embedding_kernel(x_ref, w1_ref, w2_ref, out_ref, bottleneck_ref,
                          *, compute_dtype):
    # Cast to compute dtype in-kernel (no wrapper-side copies of x / weights).
    x = x_ref[...].astype(compute_dtype)     # [TB, V]
    w1 = w1_ref[...].astype(compute_dtype)   # [V, H]  (pre-transposed l1.weight)
    w2 = w2_ref[...].astype(compute_dtype)   # [H, V]  (pre-transposed l2.weight)

    # l1: bottleneck = x @ W1^T == x[TB,V] @ w1[V,H]  (NN matmul, f32 accumulate).
    h = jnp.dot(x, w1, preferred_element_type=jnp.float32)          # [TB, H]
    bottleneck_ref[...] = h.astype(bottleneck_ref.dtype)

    # l2: logits = h @ W2^T == h[TB,H] @ w2[H,V]  (NN matmul, f32 accumulate).
    logits = jnp.dot(h.astype(compute_dtype), w2,
                     preferred_element_type=jnp.float32)            # [TB, V]

    # Numerically-stable softmax over the vocab axis (== PyTorch Softmax(1) for 2D x).
    m = jnp.max(logits, axis=-1, keepdims=True)
    e = jnp.exp(logits - m)
    denom = jnp.sum(e, axis=-1, keepdims=True)
    out_ref[...] = (e * pl.reciprocal(denom, approx=True)).astype(out_ref.dtype)


def _round_up(n, m):
    return ((n + m - 1) // m) * m


@functools.partial(jax.jit, static_argnames=("compute_dtype",))
def word_embedding_forward(x, w1, w2, *, compute_dtype=jnp.bfloat16):
    """x: [B, V]; w1: [H, V] (l1.weight); w2: [V, H] (l2.weight), bias-free.

    Returns (softmax_out [B, V], bottleneck [B, H]) matching the PyTorch module.
    """
    B, V = x.shape
    H, V1 = w1.shape
    assert V1 == V and w2.shape == (V, H)

    # One-time per-call layout fix so both in-kernel dots are MXU-natural NN matmuls
    # (no per-grid-step XLU transpose). Amortized: weights are grid-resident.
    w1_vh = w1.T    # [V, H]
    w2_hv = w2.T    # [H, V]

    # Batch tiling:
    #   * small batches (<=16): single full-batch tile (block dim == full dim is legal).
    #   * otherwise: multiple of 16 rows (bf16 sublane packing), capped at 512 rows,
    #     and sized from cdiv(B, 2) so grid_b >= 2 -> both v7x TensorCores get work.
    if B <= 16:
        tile_b = B
    else:
        tile_b = min(512, _round_up(pl.cdiv(B, 2), 16))
    grid_b = pl.cdiv(B, tile_b)

    out_shapes = (
        jax.ShapeDtypeStruct((B, V), x.dtype),   # softmax probabilities
        jax.ShapeDtypeStruct((B, H), x.dtype),   # bottleneck activations
    )

    kernel = functools.partial(word_embedding_kernel, compute_dtype=compute_dtype)

    return pl.pallas_call(
        kernel,
        out_shape=out_shapes,
        grid_spec=pltpu.PrefetchScalarGridSpec(
            num_scalar_prefetch=0,
            grid=(grid_b,),
            in_specs=[
                pl.BlockSpec((tile_b, V), lambda i: (i, 0)),   # x tile
                pl.BlockSpec((V, H), lambda i: (0, 0)),        # W1^T, grid-resident
                pl.BlockSpec((H, V), lambda i: (0, 0)),        # W2^T, grid-resident
            ],
            out_specs=[
                pl.BlockSpec((tile_b, V), lambda i: (i, 0)),   # lane-dense (V) output
                pl.BlockSpec((tile_b, H), lambda i: (i, 0)),
            ],
        ),
        compiler_params=pltpu.CompilerParams(
            dimension_semantics=("parallel",),   # batch tiles shard across TCs (v7x)
        ),
    )(x, w1_vh, w2_hv)


def reference_forward(x, w1, w2):
    h = x @ w1.T
    logits = h @ w2.T
    out = jax.nn.softmax(logits, axis=1)
    return out, h


if __name__ == "__main__":
    # Small shapes consistent with the module.
    batch = 8
    input_size = 256   # vocab size V
    hidden_size = 32   # bottleneck H

    key = jax.random.PRNGKey(0)
    kx, k1, k2 = jax.random.split(key, 3)

    x = jax.random.normal(kx, (batch, input_size), dtype=jnp.float32)

    # Deterministic init mimicking nn.Linear default: U(-1/sqrt(fan_in), 1/sqrt(fan_in))
    bound1 = 1.0 / (input_size ** 0.5)
    bound2 = 1.0 / (hidden_size ** 0.5)
    w1 = jax.random.uniform(k1, (hidden_size, input_size), jnp.float32,
                            minval=-bound1, maxval=bound1)  # l1.weight [H, V]
    w2 = jax.random.uniform(k2, (input_size, hidden_size), jnp.float32,
                            minval=-bound2, maxval=bound2)  # l2.weight [V, H]

    out, bottleneck = jax.block_until_ready(word_embedding_forward(x, w1, w2))

    ref_out, ref_bottleneck = reference_forward(x, w1, w2)

    assert out.shape == (batch, input_size)
    assert bottleneck.shape == (batch, hidden_size)
    # bf16 compute (f32 accumulation) + approx reciprocal -> loosened tolerances
    # vs the f32 reference; this is a deliberate, documented precision trade.
    assert jnp.allclose(out, ref_out, atol=2e-2, rtol=2e-2)
    assert jnp.allclose(bottleneck, ref_bottleneck, atol=2e-2, rtol=2e-2)
    assert jnp.allclose(jnp.sum(out, axis=1), 1.0, atol=1e-2)

    print("KERNEL_OK")
</pallas_src>

<mosaic_0001>
module attributes {stable_mosaic.version = 11 : i64} {
  func.func @word_embedding_kernel(%arg0: i32, %arg1: memref<8x256xf32, #tpu.memory_space<vmem>>, %arg2: memref<256x32xf32, #tpu.memory_space<vmem>>, %arg3: memref<32x256xf32, #tpu.memory_space<vmem>>, %arg4: memref<8x256xf32, #tpu.memory_space<vmem>>, %arg5: memref<8x32xf32, #tpu.memory_space<vmem>>) attributes {dimension_semantics = [#tpu.dimension_semantics<parallel>], iteration_bounds = array<i64: 1>, scalar_prefetch = 0 : i64, scratch_operands = 0 : i64, tpu.core_type = #tpu.core_type<tc>, window_params = [{transform_indices = @transform_0, window_bounds = array<i64: 8, 256>}, {pipeline_mode = #tpu.pipeline_mode<synchronous>, transform_indices = @transform_1, window_bounds = array<i64: 256, 32>}, {pipeline_mode = #tpu.pipeline_mode<synchronous>, transform_indices = @transform_2, window_bounds = array<i64: 32, 256>}, {transform_indices = @transform_3, window_bounds = array<i64: 8, 256>}, {transform_indices = @transform_4, window_bounds = array<i64: 8, 32>}]} {
    %c0 = arith.constant 0 : index
    %c0_0 = arith.constant 0 : index
    %0 = vector.load %arg1[%c0, %c0_0] : memref<8x256xf32, #tpu.memory_space<vmem>>, vector<8x256xf32>
    %1 = arith.truncf %0 : vector<8x256xf32> to vector<8x256xbf16>
    %c0_1 = arith.constant 0 : index
    %c0_2 = arith.constant 0 : index
    %2 = vector.load %arg2[%c0_1, %c0_2] : memref<256x32xf32, #tpu.memory_space<vmem>>, vector<256x32xf32>
    %3 = arith.truncf %2 : vector<256x32xf32> to vector<256x32xbf16>
    %c0_3 = arith.constant 0 : index
    %c0_4 = arith.constant 0 : index
    %4 = vector.load %arg3[%c0_3, %c0_4] : memref<32x256xf32, #tpu.memory_space<vmem>>, vector<32x256xf32>
    %5 = arith.truncf %4 : vector<32x256xf32> to vector<32x256xbf16>
    %cst = arith.constant dense<0.000000e+00> : vector<8x32xf32>
    %6 = tpu.matmul %1, %3, %cst {dimension_numbers = #tpu.dot_dimension_numbers<[1], [0], [0], [1], [0, 0, 1, 1], [], []>} : vector<8x256xbf16>, vector<256x32xbf16>, vector<8x32xf32> -> vector<8x32xf32>
    %c0_5 = arith.constant 0 : index
    %c0_6 = arith.constant 0 : index
    %7 = vector.load %arg5[%c0_5, %c0_6] : memref<8x32xf32, #tpu.memory_space<vmem>>, vector<8x32xf32>
    tpu.vector_store %arg5[%c0_5, %c0_6], %6 {strides = array<i32>} : memref<8x32xf32, #tpu.memory_space<vmem>>, vector<8x32xf32>,
    %8 = arith.truncf %6 : vector<8x32xf32> to vector<8x32xbf16>
    %cst_7 = arith.constant dense<0.000000e+00> : vector<8x256xf32>
    %9 = tpu.matmul %8, %5, %cst_7 {dimension_numbers = #tpu.dot_dimension_numbers<[1], [0], [0], [1], [0, 0, 1, 1], [], []>} : vector<8x32xbf16>, vector<32x256xbf16>, vector<8x256xf32> -> vector<8x256xf32>
    %cst_8 = arith.constant dense<0xFF800000> : vector<8xf32>
    %10 = vector.multi_reduction <maximumf>, %9, %cst_8 [1] : vector<8x256xf32> to vector<8xf32>
    %11 = vector.shape_cast %10 : vector<8xf32> to vector<8x1xf32>
    %12 = vector.broadcast %11 : vector<8x1xf32> to vector<8x256xf32>
    %13 = arith.subf %9, %12 : vector<8x256xf32>
    %14 = math.exp %13 : vector<8x256xf32>
    %cst_9 = arith.constant dense<0.000000e+00> : vector<8xf32>
    %15 = vector.multi_reduction <add>, %14, %cst_9 [1] : vector<8x256xf32> to vector<8xf32>
    %16 = vector.shape_cast %15 : vector<8xf32> to vector<8x1xf32>
    %17 = tpu.reciprocal %16 {approx = true} : vector<8x1xf32> -> vector<8x1xf32>
    %18 = vector.broadcast %17 : vector<8x1xf32> to vector<8x256xf32>
    %19 = arith.mulf %14, %18 : vector<8x256xf32>
    %c0_10 = arith.constant 0 : index
    %c0_11 = arith.constant 0 : index
    %20 = vector.load %arg4[%c0_10, %c0_11] : memref<8x256xf32, #tpu.memory_space<vmem>>, vector<8x256xf32>
    tpu.vector_store %arg4[%c0_10, %c0_11], %19 {strides = array<i32>} : memref<8x256xf32, #tpu.memory_space<vmem>>, vector<8x256xf32>,
    return
  }
  func.func @transform_0(%arg0: i32) -> (i32, i32) {
    %c0_i32 = arith.constant 0 : i32
    %c0_i32_0 = arith.constant 0 : i32
    return %arg0, %c0_i32 : i32, i32
  }
  func.func @transform_1(%arg0: i32) -> (i32, i32) {
    %c0_i32 = arith.constant 0 : i32
    %c0_i32_0 = arith.constant 0 : i32
    %c0_i32_1 = arith.constant 0 : i32
    return %c0_i32, %c0_i32_0 : i32, i32
  }
  func.func @transform_2(%arg0: i32) -> (i32, i32) {
    %c0_i32 = arith.constant 0 : i32
    %c0_i32_0 = arith.constant 0 : i32
    %c0_i32_1 = arith.constant 0 : i32
    return %c0_i32, %c0_i32_0 : i32, i32
  }
  func.func @transform_3(%arg0: i32) -> (i32, i32) {
    %c0_i32 = arith.constant 0 : i32
    %c0_i32_0 = arith.constant 0 : i32
    return %arg0, %c0_i32 : i32, i32
  }
  func.func @transform_4(%arg0: i32) -> (i32, i32) {
    %c0_i32 = arith.constant 0 : i32
    %c0_i32_0 = arith.constant 0 : i32
    return %arg0, %c0_i32 : i32, i32
  }
}

</mosaic_0001>

<llo_original>
// kernel: word_embedding_forward.1
$region0: #{word_embedding_forward.1}
  #allocation0 [shape = 'u32[]', space=smem, size = 0x4, offset = 0x4, fixed_abs, tag = 'smem constant byte address 0x4 - core index']
  #allocation1 [shape = 'u32[72,128]{1,0:T(1,128)}', space=vmem, size = 0x9000, scoped, tag = 'internal scratch']
  %s0 = inlined_call_operand.vmem [shape: f32[8,256], index: 0, kind: input, shape index: {}]
  %s1 = inlined_call_operand.vmem [shape: f32[256,32], index: 1, kind: input, shape index: {}]
  %s2 = inlined_call_operand.vmem [shape: f32[32,256], index: 2, kind: input, shape index: {}]
  %s3 = inlined_call_operand.hbm [shape: f32[8,256], index: 3, kind: output, shape index: {0}]
  %s4 = inlined_call_operand.hbm [shape: f32[8,32], index: 4, kind: output, shape index: {1}]
  %5 = xla_tuple %s3, %s4
  %s6 = sld [smem:[#allocation0]]
  $region30: #{word_embedding_forward.1} parent=0
    _
  %s8 = ssub.s32 1, %s6
  %s9 = scalar_select 0, %s8, %s6
  $region1: #{word_embedding_forward.1} parent=0
    #allocation2 [shape = 'u8[8192]{0}', space=vmem, size = 0x2000, scoped, tag = 'output window, operand 0, single buffered']
    #allocation3 [shape = 's32[1]{0}', space=sflag, size = 0x4, scoped, tag = 'scoped memory for word_embedding_forward.1']
    #allocation4 [shape = 'u8[4096]{0}', space=vmem, size = 0x1000, scoped, tag = 'output window, operand 1, single buffered']
    #allocation5 [shape = 's32[1]{0}', space=sflag, size = 0x4, scoped, tag = 'scoped memory for word_embedding_forward.1']
    %10 = vsyncpa [#allocation3], 0
    %11 = vsyncpa [#allocation5], 0
    // Predicated region
    $region2: #{word_embedding_forward.1} parent=1 // pred_check
      _
    $region3: #{word_embedding_forward.1} parent=1 // pred_check_branch
      %13 = sbr.rel (0) target = $region5
    $region4: #{word_embedding_forward.1} parent=1 // pred_region
      _
    $region5: #{word_embedding_forward.1} parent=1 // pred_fallthru
      _
    // Predicated region
    $region6: #{word_embedding_forward.1} parent=1 // pred_check
      _
    $region7: #{word_embedding_forward.1} parent=1 // pred_check_branch
      %15 = sbr.rel (0) target = $region9
    $region8: #{word_embedding_forward.1} parent=1 // pred_region
      _
    $region9: #{word_embedding_forward.1} parent=1 // pred_fallthru
      _
    // Predicated region
    $region10: #{word_embedding_forward.1} parent=1 // pred_check
      _
    $region11: #{word_embedding_forward.1} parent=1 // pred_check_branch
      %17 = sbr.rel (0) target = $region13
    $region12: #{word_embedding_forward.1} parent=1 // pred_region
      _
    $region13: #{word_embedding_forward.1} parent=1 // pred_fallthru
      _
    %v19 = vld [vmem:[%s0] sm:$0xff]
    %v20 = vld [vmem:[%s0 + $0x8] sm:$0xff]
    %v21 = vpack.c.bf16 %v19, %v19
    %v22 = vpack.c.bf16 %v20, %v20
    %v23 = vld [vmem:[%s1] sm:$0xff]
    %v24 = vld [vmem:[%s1 + $0x8] sm:$0xff]
    %v25 = vld [vmem:[%s1 + $0x10] sm:$0xff]
    %v26 = vld [vmem:[%s1 + $0x18] sm:$0xff]
    %v27 = vld [vmem:[%s1 + $0x20] sm:$0xff]
    %v28 = vld [vmem:[%s1 + $0x28] sm:$0xff]
    %v29 = vld [vmem:[%s1 + $0x30] sm:$0xff]
    %v30 = vld [vmem:[%s1 + $0x38] sm:$0xff]
    %v31 = vld [vmem:[%s1 + $0x40] sm:$0xff]
    %v32 = vld [vmem:[%s1 + $0x48] sm:$0xff]
    %v33 = vld [vmem:[%s1 + $0x50] sm:$0xff]
    %v34 = vld [vmem:[%s1 + $0x58] sm:$0xff]
    %v35 = vld [vmem:[%s1 + $0x60] sm:$0xff]
    %v36 = vld [vmem:[%s1 + $0x68] sm:$0xff]
    %v37 = vld [vmem:[%s1 + $0x70] sm:$0xff]
    %v38 = vld [vmem:[%s1 + $0x78] sm:$0xff]
    %v39 = vld [vmem:[%s1 + $0x80] sm:$0xff]
    %v40 = vld [vmem:[%s1 + $0x88] sm:$0xff]
    %v41 = vld [vmem:[%s1 + $0x90] sm:$0xff]
    %v42 = vld [vmem:[%s1 + $0x98] sm:$0xff]
    %v43 = vld [vmem:[%s1 + $0xa0] sm:$0xff]
    %v44 = vld [vmem:[%s1 + $0xa8] sm:$0xff]
    %v45 = vld [vmem:[%s1 + $0xb0] sm:$0xff]
    %v46 = vld [vmem:[%s1 + $0xb8] sm:$0xff]
    %v47 = vld [vmem:[%s1 + $0xc0] sm:$0xff]
    %v48 = vld [vmem:[%s1 + $0xc8] sm:$0xff]
    %v49 = vld [vmem:[%s1 + $0xd0] sm:$0xff]
    %v50 = vld [vmem:[%s1 + $0xd8] sm:$0xff]
    %v51 = vld [vmem:[%s1 + $0xe0] sm:$0xff]
    %v52 = vld [vmem:[%s1 + $0xe8] sm:$0xff]
    %v53 = vld [vmem:[%s1 + $0xf0] sm:$0xff]
    %v54 = vld [vmem:[%s1 + $0xf8] sm:$0xff]
    %v55 = vpack.c.bf16 %v24, %v23
    %v56 = vpack.c.bf16 %v26, %v25
    %v57 = vpack.c.bf16 %v28, %v27
    %v58 = vpack.c.bf16 %v30, %v29
    %v59 = vpack.c.bf16 %v32, %v31
    %v60 = vpack.c.bf16 %v34, %v33
    %v61 = vpack.c.bf16 %v36, %v35
    %v62 = vpack.c.bf16 %v38, %v37
    %v63 = vpack.c.bf16 %v40, %v39
    %v64 = vpack.c.bf16 %v42, %v41
    %v65 = vpack.c.bf16 %v44, %v43
    %v66 = vpack.c.bf16 %v46, %v45
    %v67 = vpack.c.bf16 %v48, %v47
    %v68 = vpack.c.bf16 %v50, %v49
    %v69 = vpack.c.bf16 %v52, %v51
    %v70 = vpack.c.bf16 %v54, %v53
    %v71 = vld [vmem:[%s2] sm:$0xff]
    %v72 = vld [vmem:[%s2 + $0x8] sm:$0xff]
    %v73 = vld [vmem:[%s2 + $0x10] sm:$0xff]
    %v74 = vld [vmem:[%s2 + $0x18] sm:$0xff]
    %v75 = vld [vmem:[%s2 + $0x20] sm:$0xff]
    %v76 = vld [vmem:[%s2 + $0x28] sm:$0xff]
    %v77 = vld [vmem:[%s2 + $0x30] sm:$0xff]
    %v78 = vld [vmem:[%s2 + $0x38] sm:$0xff]
    %v79 = vpack.c.bf16 %v73, %v71
    %v80 = vpack.c.bf16 %v74, %v72
    %v81 = vpack.c.bf16 %v77, %v75
    %v82 = vpack.c.bf16 %v78, %v76
    %83 = vmatpush.bf16.msra.mxu0 %v62
    %84 = vmatpush.bf16.msra.mxu0 %v61
    %85 = vmatpush.bf16.msra.mxu0 %v60
    %86 = vmatpush.bf16.msra.mxu0 %v59
    %87 = vmatpush.bf16.msra.mxu0 %v58
    %88 = vmatpush.bf16.msra.mxu0 %v57
    %89 = vmatpush.bf16.msra.mxu0 %v56
    %90 = vmatpush.bf16.msra.mxu0 %v55
    %91 = vmatmul.bf16.gmra.mxu0 %v21
    %v92 = vpop.f32.mrf.mxu0
    %v93 = vadd.f32 0.0, %v92
    %v94 = vpop.f32.mrf.mxu0
    %95 = vdwg.mxu0
    %96 = vmatpush.bf16.msra.mxu0 %v70
    %97 = vmatpush.bf16.msra.mxu0 %v69
    %98 = vmatpush.bf16.msra.mxu0 %v68
    %99 = vmatpush.bf16.msra.mxu0 %v67
    %100 = vmatpush.bf16.msra.mxu0 %v66
    %101 = vmatpush.bf16.msra.mxu0 %v65
    %102 = vmatpush.bf16.msra.mxu0 %v64
    %103 = vmatpush.bf16.msra.mxu0 %v63
    %104 = vmatmul.bf16.gmra.mxu0 %v22
    %v105 = vpop.f32.mrf.mxu0
    %v106 = vadd.f32 %v93, %v105
    %v107 = vpop.f32.mrf.mxu0
    %108 = vdwg.mxu0
    %vm109 = vcmask 261120
    %110 = vst.msk [vmem:[#allocation4] sm:$0xff] %vm109, %v106
    %v111 = vpack.c.bf16 %v106, %v106
    %v113 = vsel %vm109, %v111, 0
    %115 = vmatpush.bf16.msra.mxu0 0
    %116 = vmatpush.bf16.msra.mxu0 0
    %117 = vmatpush.bf16.msra.mxu0 0
    %118 = vmatpush.bf16.msra.mxu0 0
    %119 = vmatpush.bf16.msra.mxu0 0
    %120 = vmatpush.bf16.msra.mxu0 0
    %121 = vmatpush.bf16.msra.mxu0 %v81
    %122 = vmatpush.bf16.msra.mxu0 %v79
    %123 = vmatmul.bf16.gmra.mxu0 %v113
    %v124 = vpop.f32.mrf.mxu0
    %v125 = vadd.f32 0.0, %v124
    %v126 = vpop.f32.mrf.mxu0
    %127 = vdwg.mxu0
    %128 = vmatpush.bf16.msra.mxu0 0
    %129 = vmatpush.bf16.msra.mxu0 0
    %130 = vmatpush.bf16.msra.mxu0 0
    %131 = vmatpush.bf16.msra.mxu0 0
    %132 = vmatpush.bf16.msra.mxu0 0
    %133 = vmatpush.bf16.msra.mxu0 0
    %134 = vmatpush.bf16.msra.mxu0 %v82
    %135 = vmatpush.bf16.msra.mxu0 %v80
    %136 = vmatmul.bf16.gmra.mxu0 %v113
    %v137 = vpop.f32.mrf.mxu0
    %v138 = vadd.f32 0.0, %v137
    %v139 = vpop.f32.mrf.mxu0
    %140 = vdwg.mxu0
    %v141 = vmax.f32 %v125, %v138
    %142 = vmax.xlane.f32.xlu0 %v141
    %v143 = vpop.xlane.xlu0 %142
    %v144 = vsub.f32 %v125, %v143
    %v145 = vsub.f32 %v138, %v143
    %v146 = vmul.f32 %v144, 1.442695
    %v147 = vpow.pop %v146
    %v148 = vmul.f32 %v145, 1.442695
    %v149 = vpow.pop %v148
    %v150 = vadd.f32 %v147, %v149
    %151 = vadd.xlane.f32.xlu0 %v150
    %v152 = vpop.xlane.xlu0 %151
    %v153 = vrcp.pop %v152
    %v154 = vmul.f32 %v147, %v153
    %v155 = vmul.f32 %v149, %v153
    %156 = vst [vmem:[#allocation2] sm:$0xff] %v154
    %157 = vst [vmem:[#allocation2 + $0x8] sm:$0xff] %v155
    // Predicated region
    $region14: #{word_embedding_forward.1} parent=1 // pred_check
      _
    $region15: #{word_embedding_forward.1} parent=1 // pred_check_branch
      %159 = sbr.rel (0) target = $region17
    $region16: #{word_embedding_forward.1} parent=1 // pred_region
      %161 = vsyncadd [#allocation3], 0
      %s163 = sshll.u32 [#allocation2], 4
      %s164 = int_to_ptr.vmem [resolvable:$true] %s163
      %s165 = sshll.u32 %s3, 4
      %s166 = int_to_ptr.hbm [resolvable:$true] %s165
      %168 = dma.vmem_to_hbm [thread:$0]  %s164, 256, %s166, [#allocation3]
    $region17: #{word_embedding_forward.1} parent=1 // pred_fallthru
      _
    // Predicated region
    $region18: #{word_embedding_forward.1} parent=1 // pred_check
      _
    $region19: #{word_embedding_forward.1} parent=1 // pred_check_branch
      %170 = sbr.rel (0) target = $region21
    $region20: #{word_embedding_forward.1} parent=1 // pred_region
      %172 = vsyncadd [#allocation5], 0
      %s174 = sshll.u32 [#allocation4], 4
      %s175 = int_to_ptr.vmem [resolvable:$true] %s174
      %s176 = sshll.u32 %s4, 4
      %s177 = int_to_ptr.hbm [resolvable:$true] %s176
      %179 = dma.vmem_to_hbm [thread:$0]  %s175, 128, %s177, [#allocation5]
    $region21: #{word_embedding_forward.1} parent=1 // pred_fallthru
      _
    // Predicated region
    $region22: #{word_embedding_forward.1} parent=1 // pred_check
      _
    $region23: #{word_embedding_forward.1} parent=1 // pred_check_branch
      %181 = sbr.rel (0) target = $region25
    $region24: #{word_embedding_forward.1} parent=1 // pred_region
      %183 = dma.done [#allocation3], 256
    $region25: #{word_embedding_forward.1} parent=1 // pred_fallthru
      _
    // Predicated region
    $region26: #{word_embedding_forward.1} parent=1 // pred_check
      _
    $region27: #{word_embedding_forward.1} parent=1 // pred_check_branch
      %185 = sbr.rel (0) target = $region29
    $region28: #{word_embedding_forward.1} parent=1 // pred_region
      %187 = dma.done [#allocation5], 128
    $region29: #{word_embedding_forward.1} parent=1 // pred_fallthru
      _
    %188 = vsyncpa [#allocation3], 1
    %189 = vsyncpa [#allocation5], 1

</llo_original>
